<compile_context>
chip_gen: v7x
topology: tpu7x:2x2x1
jax: 0.10.0
libtpu: 0.0.40
codegen_flags: <defaults>
</compile_context>

<pallas_src>
import functools
import math

import jax
import jax.numpy as jnp
from jax.experimental import pallas as pl
from jax.experimental.pallas import tpu as pltpu

_MiB = 1024 * 1024
_BATCH_BLOCK_TARGET_BYTES = 8 * _MiB   # per-grid-step target for the fused path
_TILE_TARGET_BYTES = 4 * _MiB          # per-buffer target for the two-phase path
_WIDTH_CAP = 1024                      # cap on the lane-dense re-view width


def make_divisible(value, divisor=8, min_value=None):
    """mmcv.cnn.make_divisible (used for the SE hidden width)."""
    if min_value is None:
        min_value = divisor
    new_value = max(min_value, int(value + divisor / 2) // divisor * divisor)
    if new_value < 0.9 * value:
        new_value += divisor
    return new_value


@functools.lru_cache(maxsize=1)
def _vmem_capacity_bytes():
    """Generation-aware VMEM size (128 MiB v5e/v6e, 64 MiB v7x); safe fallback."""
    try:
        cap = int(pltpu.get_tpu_info().vmem_capacity_bytes)
        if cap > 0:
            return cap
    except Exception:
        pass
    return 64 * _MiB   # conservative (v7x-sized)


def _vmem_request_cap():
    return (_vmem_capacity_bytes() * 7) // 8


def _compiler_params(semantics, buffer_bytes, temp_bytes=0):
    """Explicit scoped-VMEM request: double-buffered listed buffers + temps."""
    need = 2 * sum(int(b) for b in buffer_bytes) + int(temp_bytes)
    limit = int(min(_vmem_request_cap(), max(32 * _MiB, need + need // 4)))
    return pltpu.CompilerParams(dimension_semantics=semantics,
                                vmem_limit_bytes=limit)


def _fused_block_cap_bytes(itemsize, weight_bytes):
    """Largest per-grid-step (NB, rows, width) block allowed on the fused path.

    Budget: double-buffered in + out (4x block) plus up to two full-size f32
    elementwise temporaries (promote + product) plus the resident weights.
    """
    denom = 4 + (2 * 4) // max(1, int(itemsize))     # 6 for f32, 8 for bf16
    return max(0, (_vmem_request_cap() - 2 * int(weight_bytes) - 2 * _MiB) // denom)


def _pick_width(l, c, cap=_WIDTH_CAP):
    """Lane-dense re-view width: a multiple of both 128 and C that divides L*C."""
    total = l * c
    base = (c // math.gcd(c, 128)) * 128             # lcm(C, 128)
    if base > max(c, cap) or total % base != 0:
        return c, 1                                  # no clean packing
    width = base
    m = 2 * base
    while m <= max(base, cap):                       # widen while still a divisor
        if total % m == 0:
            width = m
        m += base
    return width, width // c


def _pick_row_tile(rows, row_bytes, itemsize, target_bytes):
    """Largest sublane-aligned row tile within the byte budget (non-divisor OK)."""
    sub = max(8, 32 // max(1, int(itemsize)))        # 8 f32, 16 bf16, 32 int8
    cap = max(1, int(target_bytes) // max(1, int(row_bytes)))
    if cap >= rows:
        return rows                                  # full extent -> exempt tile
    return max(sub, (cap // sub) * sub)


def _pick_batch_block(n, per_batch_bytes, block_cap_bytes,
                      target_bytes=_BATCH_BLOCK_TARGET_BYTES):
    """Batch block NB so each grid step moves ~target bytes, keeping >=4 steps."""
    budget = min(int(target_bytes), int(block_cap_bytes))
    nb = max(1, min(n, budget // max(1, int(per_batch_bytes))))
    nb = min(nb, n // 4) if n >= 4 else 1
    nb = max(1, nb)
    while n % nb:                                    # must divide the batch
        nb -= 1
    return nb


# ---------------------------------------------------------------------------
# Kernels
# ---------------------------------------------------------------------------

def _se_fused_kernel(x_ref, w1_ref, b1_ref, w2_ref, b2_ref, o_ref, *, inv_l):
    """Fused squeeze + excitation + scale on an (NB, rows, width) block.

    Lane w of `width` is channel w % C; the packed-sum fold and the gate
    un-tiling are pre-baked into the (width, Cmid)/(Cmid, width) weights.
    """
    x = x_ref[...]                                               # (NB, rows, width)
    s = jnp.sum(x, axis=1, dtype=jnp.float32) * inv_l            # (NB, width)
    h = jnp.dot(s, w1_ref[...], preferred_element_type=jnp.float32) + b1_ref[...]
    h = jnp.maximum(h, 0.0)                                      # ReLU
    g = jnp.dot(h, w2_ref[...], preferred_element_type=jnp.float32) + b2_ref[...]
    g = jnp.clip((g + 3.0) * (1.0 / 6.0), 0.0, 1.0)              # HSigmoid, f32
    # Multiply with the f32 gate; only the product is cast back (bf16-safe).
    o_ref[...] = (x * g[:, None, :]).astype(o_ref.dtype)


def _se_gate_kernel(x_ref, w1_ref, b1_ref, w2_ref, b2_ref, g_ref, acc_ref, *,
                    inv_l, rows_total, tile_rows, needs_mask):
    """Two-phase, phase 1: stream row tiles, accumulate the packed channel sum.

    grid = (N, cdiv(rows, tile_rows)); the row axis is the reduction axis.
    The excitation MLP runs only on the last tile (off the per-step hot path)
    and writes the gate already tiled to `width` lanes.
    """
    li = pl.program_id(1)

    @pl.when(li == 0)
    def _():
        acc_ref[...] = jnp.zeros_like(acc_ref)

    x = x_ref[0]                                                 # (tile_rows, width)
    if needs_mask:                                               # static flag
        row = li * tile_rows + jax.lax.broadcasted_iota(jnp.int32, x.shape, 0)
        x = jnp.where(row < rows_total, x, jnp.zeros_like(x))
    acc_ref[...] += jnp.sum(x, axis=0, dtype=jnp.float32, keepdims=True)

    @pl.when(li == pl.num_programs(1) - 1)
    def _():
        s = acc_ref[...] * inv_l                                 # (1, width)
        h = jnp.dot(s, w1_ref[...], preferred_element_type=jnp.float32) + b1_ref[...]
        h = jnp.maximum(h, 0.0)
        g = jnp.dot(h, w2_ref[...], preferred_element_type=jnp.float32) + b2_ref[...]
        g_ref[0] = jnp.clip((g + 3.0) * (1.0 / 6.0), 0.0, 1.0)   # (1, width) f32


def _se_scale_kernel(x_ref, g_ref, o_ref):
    """Two-phase, phase 2: lane-dense elementwise scale of a (1, TR, width) tile."""
    o_ref[0] = (x_ref[0] * g_ref[0]).astype(o_ref.dtype)


# ---------------------------------------------------------------------------
# Wrapper
# ---------------------------------------------------------------------------

def se_attention_forward(x, w1, b1, w2, b2, *, donate_x=False,
                         fused_block_cap_bytes=None,
                         tile_target_bytes=_TILE_TARGET_BYTES):
    """x: (N, L, C).  w1: (C, Cmid), b1: (Cmid,), w2: (Cmid, C), b2: (C,).

    Returns (N, L, C) in x.dtype.  dropout_layer=None in the module -> identity.
    Set donate_x=True only if the caller donates x (enables output aliasing).
    """
    N, L, C = x.shape
    Cmid = w1.shape[1]
    dtype = x.dtype
    itemsize = jnp.dtype(dtype).itemsize
    inv_l = float(1.0 / L)

    # Lane-dense re-view (free, contiguous): lane w of `width` is channel w % C.
    width, pack = _pick_width(L, C)
    rows = (L * C) // width
    x_view = x.reshape(N, rows, width) if width != C else x

    # Present the excitation weights in the width domain: folds the packed-sum
    # reduction (tiled W1 rows) and the gate un-tiling (tiled W2 cols / b2).
    if pack > 1:
        w1v = jnp.tile(w1, (pack, 1))              # (width, Cmid)
        w2v = jnp.tile(w2, (1, pack))              # (Cmid, width)
        b2v = jnp.tile(b2, pack)                   # (width,)
    else:
        w1v, w2v, b2v = w1, w2, b2
    b1v = b1.reshape(1, Cmid)
    b2v = b2v.reshape(1, width)
    weight_bytes = 4 * (width * Cmid + Cmid + Cmid * width + width)

    weight_specs = [
        pl.BlockSpec((width, Cmid), lambda *a: (0, 0)),
        pl.BlockSpec((1, Cmid), lambda *a: (0, 0)),
        pl.BlockSpec((Cmid, width), lambda *a: (0, 0)),
        pl.BlockSpec((1, width), lambda *a: (0, 0)),
    ]

    per_batch_bytes = rows * width * itemsize
    block_cap = (int(fused_block_cap_bytes) if fused_block_cap_bytes is not None
                 else _fused_block_cap_bytes(itemsize, weight_bytes))
    aliases = {0: 0} if donate_x else {}

    # ---------------- fused path: one read + one write of x ----------------
    if per_batch_bytes <= block_cap:
        nb = _pick_batch_block(N, per_batch_bytes, block_cap)
        block_bytes = nb * per_batch_bytes
        out = pl.pallas_call(
            functools.partial(_se_fused_kernel, inv_l=inv_l),
            out_shape=jax.ShapeDtypeStruct((N, rows, width), dtype),
            grid_spec=pltpu.PrefetchScalarGridSpec(
                num_scalar_prefetch=0,
                grid=(N // nb,),
                in_specs=[pl.BlockSpec((nb, rows, width), lambda n: (n, 0, 0))]
                + weight_specs,
                out_specs=pl.BlockSpec((nb, rows, width), lambda n: (n, 0, 0)),
            ),
            compiler_params=_compiler_params(
                ("parallel",),
                (block_bytes, block_bytes, weight_bytes),
                temp_bytes=2 * block_bytes * 4 // itemsize),
            input_output_aliases=aliases,
        )(x_view, w1v, b1v, w2v, b2v)
        return out.reshape(N, L, C)

    # ---------------- two-phase path: reduce-to-gate, then scale -----------
    row_bytes = width * itemsize
    tl = _pick_row_tile(rows, row_bytes, itemsize, tile_target_bytes)
    gate = pl.pallas_call(
        functools.partial(_se_gate_kernel, inv_l=inv_l, rows_total=rows,
                          tile_rows=tl, needs_mask=(rows % tl) != 0),
        out_shape=jax.ShapeDtypeStruct((N, 1, width), jnp.float32),
        grid_spec=pltpu.PrefetchScalarGridSpec(
            num_scalar_prefetch=0,
            grid=(N, pl.cdiv(rows, tl)),
            in_specs=[pl.BlockSpec((1, tl, width), lambda n, l: (n, l, 0))]
            + weight_specs,
            out_specs=pl.BlockSpec((1, 1, width), lambda n, l: (n, 0, 0)),
            scratch_shapes=[pltpu.VMEM((1, width), jnp.float32)],
        ),
        compiler_params=_compiler_params(
            ("parallel", "arbitrary"),
            (tl * row_bytes, width * 4, weight_bytes),
            temp_bytes=2 * tl * row_bytes * 4 // itemsize),
    )(x_view, w1v, b1v, w2v, b2v)

    tr = _pick_row_tile(rows, row_bytes, itemsize, tile_target_bytes)
    y = pl.pallas_call(
        _se_scale_kernel,
        out_shape=jax.ShapeDtypeStruct((N, rows, width), dtype),
        grid_spec=pltpu.PrefetchScalarGridSpec(
            num_scalar_prefetch=0,
            grid=(N, pl.cdiv(rows, tr)),
            in_specs=[
                pl.BlockSpec((1, tr, width), lambda n, r: (n, r, 0)),
                pl.BlockSpec((1, 1, width), lambda n, r: (n, 0, 0)),
            ],
            out_specs=pl.BlockSpec((1, tr, width), lambda n, r: (n, r, 0)),
        ),
        compiler_params=_compiler_params(
            ("parallel", "parallel"),
            (tr * row_bytes, tr * row_bytes, width * 4),
            temp_bytes=2 * tr * row_bytes * 4 // itemsize),
        input_output_aliases=aliases,
    )(x_view, gate)
    return y.reshape(N, L, C)


def se_attention_reference(x, w1, b1, w2, b2):
    """Pure-JAX reference mirroring the PyTorch forward (NLC layout)."""
    s = jnp.mean(x, axis=1)                               # (N, C)
    h = jnp.maximum(s @ w1 + b1, 0.0)                     # (N, Cmid)
    g = jnp.clip((h @ w2 + b2 + 3.0) / 6.0, 0.0, 1.0)     # (N, C)
    return x * g[:, None, :]


def _make_inputs(key, N, L, C):
    Cmid = make_divisible(C // 16, 8)
    kx, kw1, kb1, kw2, kb2 = jax.random.split(key, 5)
    x = jax.random.normal(kx, (N, L, C), dtype=jnp.float32)
    # conv1: Conv2d(C, Cmid, 1) weight (Cmid, C, 1, 1) -> stored transposed (C, Cmid)
    w1 = jax.random.normal(kw1, (C, Cmid), dtype=jnp.float32) * 0.1
    b1 = jax.random.normal(kb1, (Cmid,), dtype=jnp.float32) * 0.1
    # conv2: Conv2d(Cmid, C, 1) weight (C, Cmid, 1, 1) -> stored transposed (Cmid, C)
    w2 = jax.random.normal(kw2, (Cmid, C), dtype=jnp.float32) * 0.1
    b2 = jax.random.normal(kb2, (C,), dtype=jnp.float32) * 0.1
    return x, w1, b1, w2, b2


if __name__ == "__main__":
    key = jax.random.PRNGKey(0)
    ks = jax.random.split(key, 4)

    # Case 1: C=64 (<128), H=W=16 -> lane-packed fused path (width 1024).
    x, w1, b1, w2, b2 = _make_inputs(ks[0], N=2, L=16 * 16, C=64)
    out = jax.block_until_ready(se_attention_forward(x, w1, b1, w2, b2))
    ref = se_attention_reference(x, w1, b1, w2, b2)
    assert out.shape == x.shape
    assert jnp.allclose(out, ref, atol=1e-5, rtol=1e-5), "fused packed path mismatch"

    # Case 2: C=320 (not a multiple of 128), awkward H=W=14 -> fused, width 640.
    x2, w12, b12, w22, b22 = _make_inputs(ks[1], N=2, L=14 * 14, C=320)
    out2 = jax.block_until_ready(se_attention_forward(x2, w12, b12, w22, b22))
    ref2 = se_attention_reference(x2, w12, b12, w22, b22)
    assert jnp.allclose(out2, ref2, atol=1e-5, rtol=1e-5), "fused C=320 path mismatch"

    # Case 3: force the two-phase path (tiny caps) with a non-divisor row count
    # (L=1000 -> rows=100, row tile 8 -> tail masking exercised).
    x3, w13, b13, w23, b23 = _make_inputs(ks[2], N=2, L=1000, C=64)
    out3 = jax.block_until_ready(se_attention_forward(
        x3, w13, b13, w23, b23,
        fused_block_cap_bytes=32 * 1024, tile_target_bytes=16 * 1024))
    ref3 = se_attention_reference(x3, w13, b13, w23, b23)
    assert jnp.allclose(out3, ref3, atol=1e-5, rtol=1e-5), "two-phase path mismatch"

    # Case 4: bf16 activations, batch-blocked fused path (NB=2), f32 gate math.
    x4, w14, b14, w24, b24 = _make_inputs(ks[3], N=8, L=8 * 8, C=128)
    x4 = x4.astype(jnp.bfloat16)
    out4 = jax.block_until_ready(se_attention_forward(x4, w14, b14, w24, b24))
    ref4 = se_attention_reference(x4.astype(jnp.float32), w14, b14, w24, b24)
    assert out4.dtype == jnp.bfloat16
    assert jnp.allclose(out4.astype(jnp.float32), ref4, atol=3e-2, rtol=3e-2), \
        "bf16 fused path mismatch"

    print("KERNEL_OK")
</pallas_src>

<mosaic_0001>
module attributes {stable_mosaic.version = 11 : i64} {
  func.func @_se_fused_kernel(%arg0: i32, %arg1: memref<1x16x1024xf32, #tpu.memory_space<vmem>>, %arg2: memref<1024x8xf32, #tpu.memory_space<vmem>>, %arg3: memref<1x8xf32, #tpu.memory_space<vmem>>, %arg4: memref<8x1024xf32, #tpu.memory_space<vmem>>, %arg5: memref<1x1024xf32, #tpu.memory_space<vmem>>, %arg6: memref<1x16x1024xf32, #tpu.memory_space<vmem>>) attributes {dimension_semantics = [#tpu.dimension_semantics<parallel>], iteration_bounds = array<i64: 2>, scalar_prefetch = 0 : i64, scratch_operands = 0 : i64, tpu.core_type = #tpu.core_type<tc>, window_params = [{transform_indices = @transform_0, window_bounds = array<i64: 1, 16, 1024>}, {pipeline_mode = #tpu.pipeline_mode<synchronous>, transform_indices = @transform_1, window_bounds = array<i64: 1024, 8>}, {pipeline_mode = #tpu.pipeline_mode<synchronous>, transform_indices = @transform_2, window_bounds = array<i64: 1, 8>}, {pipeline_mode = #tpu.pipeline_mode<synchronous>, transform_indices = @transform_3, window_bounds = array<i64: 8, 1024>}, {pipeline_mode = #tpu.pipeline_mode<synchronous>, transform_indices = @transform_4, window_bounds = array<i64: 1, 1024>}, {transform_indices = @transform_5, window_bounds = array<i64: 1, 16, 1024>}]} {
    %c0 = arith.constant 0 : index
    %c0_0 = arith.constant 0 : index
    %c0_1 = arith.constant 0 : index
    %0 = vector.load %arg1[%c0, %c0_0, %c0_1] : memref<1x16x1024xf32, #tpu.memory_space<vmem>>, vector<1x16x1024xf32>
    %cst = arith.constant dense<0.000000e+00> : vector<1x1024xf32>
    %1 = vector.multi_reduction <add>, %0, %cst [1] : vector<1x16x1024xf32> to vector<1x1024xf32>
    %cst_2 = arith.constant 3.906250e-03 : f32
    %2 = vector.broadcast %cst_2 : f32 to vector<1x1024xf32>
    %3 = arith.mulf %1, %2 : vector<1x1024xf32>
    %c0_3 = arith.constant 0 : index
    %c0_4 = arith.constant 0 : index
    %4 = vector.load %arg2[%c0_3, %c0_4] : memref<1024x8xf32, #tpu.memory_space<vmem>>, vector<1024x8xf32>
    %cst_5 = arith.constant dense<0.000000e+00> : vector<1x8xf32>
    %5 = tpu.matmul %3, %4, %cst_5 {dimension_numbers = #tpu.dot_dimension_numbers<[1], [0], [0], [1], [0, 0, 1, 1], [], []>} : vector<1x1024xf32>, vector<1024x8xf32>, vector<1x8xf32> -> vector<1x8xf32>
    %c0_6 = arith.constant 0 : index
    %c0_7 = arith.constant 0 : index
    %6 = vector.load %arg3[%c0_6, %c0_7] : memref<1x8xf32, #tpu.memory_space<vmem>>, vector<1x8xf32>
    %7 = arith.addf %5, %6 : vector<1x8xf32>
    %cst_8 = arith.constant 0.000000e+00 : f32
    %8 = vector.broadcast %cst_8 : f32 to vector<1x8xf32>
    %9 = arith.maximumf %7, %8 : vector<1x8xf32>
    %c0_9 = arith.constant 0 : index
    %c0_10 = arith.constant 0 : index
    %10 = vector.load %arg4[%c0_9, %c0_10] : memref<8x1024xf32, #tpu.memory_space<vmem>>, vector<8x1024xf32>
    %cst_11 = arith.constant dense<0.000000e+00> : vector<1x1024xf32>
    %11 = tpu.matmul %9, %10, %cst_11 {dimension_numbers = #tpu.dot_dimension_numbers<[1], [0], [0], [1], [0, 0, 1, 1], [], []>} : vector<1x8xf32>, vector<8x1024xf32>, vector<1x1024xf32> -> vector<1x1024xf32>
    %c0_12 = arith.constant 0 : index
    %c0_13 = arith.constant 0 : index
    %12 = vector.load %arg5[%c0_12, %c0_13] : memref<1x1024xf32, #tpu.memory_space<vmem>>, vector<1x1024xf32>
    %13 = arith.addf %11, %12 : vector<1x1024xf32>
    %cst_14 = arith.constant 3.000000e+00 : f32
    %14 = vector.broadcast %cst_14 : f32 to vector<1x1024xf32>
    %15 = arith.addf %13, %14 : vector<1x1024xf32>
    %cst_15 = arith.constant 0.166666672 : f32
    %16 = vector.broadcast %cst_15 : f32 to vector<1x1024xf32>
    %17 = arith.mulf %15, %16 : vector<1x1024xf32>
    %cst_16 = arith.constant 0.000000e+00 : f32
    %cst_17 = arith.constant 1.000000e+00 : f32
    %18 = vector.broadcast %cst_16 : f32 to vector<1x1024xf32>
    %19 = arith.maximumf %18, %17 : vector<1x1024xf32>
    %20 = vector.broadcast %cst_17 : f32 to vector<1x1024xf32>
    %21 = arith.minimumf %20, %19 : vector<1x1024xf32>
    %22 = vector.shape_cast %21 : vector<1x1024xf32> to vector<1x1x1024xf32>
    %23 = vector.broadcast %22 : vector<1x1x1024xf32> to vector<1x16x1024xf32>
    %24 = arith.mulf %0, %23 : vector<1x16x1024xf32>
    %c0_18 = arith.constant 0 : index
    %c0_19 = arith.constant 0 : index
    %c0_20 = arith.constant 0 : index
    %25 = vector.load %arg6[%c0_18, %c0_19, %c0_20] : memref<1x16x1024xf32, #tpu.memory_space<vmem>>, vector<1x16x1024xf32>
    tpu.vector_store %arg6[%c0_18, %c0_19, %c0_20], %24 {strides = array<i32>} : memref<1x16x1024xf32, #tpu.memory_space<vmem>>, vector<1x16x1024xf32>,
    return
  }
  func.func @transform_0(%arg0: i32) -> (i32, i32, i32) {
    %c0_i32 = arith.constant 0 : i32
    %c0_i32_0 = arith.constant 0 : i32
    %c0_i32_1 = arith.constant 0 : i32
    return %arg0, %c0_i32, %c0_i32_0 : i32, i32, i32
  }
  func.func @transform_1(%arg0: i32) -> (i32, i32) {
    %c0_i32 = arith.constant 0 : i32
    %c0_i32_0 = arith.constant 0 : i32
    %c0_i32_1 = arith.constant 0 : i32
    return %c0_i32, %c0_i32_0 : i32, i32
  }
  func.func @transform_2(%arg0: i32) -> (i32, i32) {
    %c0_i32 = arith.constant 0 : i32
    %c0_i32_0 = arith.constant 0 : i32
    %c0_i32_1 = arith.constant 0 : i32
    return %c0_i32, %c0_i32_0 : i32, i32
  }
  func.func @transform_3(%arg0: i32) -> (i32, i32) {
    %c0_i32 = arith.constant 0 : i32
    %c0_i32_0 = arith.constant 0 : i32
    %c0_i32_1 = arith.constant 0 : i32
    return %c0_i32, %c0_i32_0 : i32, i32
  }
  func.func @transform_4(%arg0: i32) -> (i32, i32) {
    %c0_i32 = arith.constant 0 : i32
    %c0_i32_0 = arith.constant 0 : i32
    %c0_i32_1 = arith.constant 0 : i32
    return %c0_i32, %c0_i32_0 : i32, i32
  }
  func.func @transform_5(%arg0: i32) -> (i32, i32, i32) {
    %c0_i32 = arith.constant 0 : i32
    %c0_i32_0 = arith.constant 0 : i32
    %c0_i32_1 = arith.constant 0 : i32
    return %arg0, %c0_i32, %c0_i32_0 : i32, i32, i32
  }
}

</mosaic_0001>

<llo_original>
// kernel: tpu_custom_call.1
$region0: #{tpu_custom_call.1}
  #allocation0 [shape = 'u32[]', space=smem, size = 0x4, offset = 0x4, fixed_abs, tag = 'smem constant byte address 0x4 - core index']
  #allocation1 [shape = 'u32[144,128]{1,0:T(1,128)}', space=vmem, size = 0x12000, scoped, tag = 'internal scratch']
  %s0 = inlined_call_operand.vmem [shape: f32[2,16,1024], index: 0, kind: input, shape index: {}]
  %s1 = inlined_call_operand.vmem [shape: f32[1024,8], index: 1, kind: input, shape index: {}]
  %s2 = inlined_call_operand.vmem [shape: f32[1,8], index: 2, kind: input, shape index: {}]
  %s3 = inlined_call_operand.vmem [shape: f32[8,1024], index: 3, kind: input, shape index: {}]
  %s4 = inlined_call_operand.vmem [shape: f32[1,1024], index: 4, kind: input, shape index: {}]
  %s5 = inlined_call_operand.hbm [shape: f32[2,16,1024], index: 5, kind: output, shape index: {}]
  %s6 = sld [smem:[#allocation0]]
  $region53: #{tpu_custom_call.1} parent=0
    _
  %s8 = ssub.s32 1, %s6
  %s9 = scalar_select 0, %s8, %s6
  $region1: #{tpu_custom_call.1} parent=0
    #allocation2 [shape = 'u8[131072]{0}', space=vmem, size = 0x20000, scoped, tag = 'output window, operand 0']
    #allocation3 [shape = 's32[2]{0}', space=sflag, size = 0x8, scoped, tag = 'scoped memory for tpu_custom_call.1']
    %10 = vsyncpa [#allocation3], 0
    %s11 = scalar_lea.sflag [#allocation3], 1
    %12 = vsyncpa %s11, 0
    loop: start=0, step=1, limit=4
    $region2: #{tpu_custom_call.1} parent=1 // loop_pre_header
      _
    $region3: #{tpu_custom_call.1} parent=1 // loop_header
      %s14 = sphi 0, %s18
      %p15 = scmp.ge.s32.totalorder %s14, 4
      %s24 = sphi 0, %s26
      %s27 = sphi 0, %s24
      %s28 = sphi 0, %s27
      %s44 = sphi 0, %s28
      %s48 = sphi 0, %s48
      %s50 = sphi 0, %s48
      %s51 = sphi 0, %s50
      %s65 = sphi 0, %s51
      %s69 = sphi 0, %s69
      %s71 = sphi 0, %s69
      %s72 = sphi 0, %s71
      %s86 = sphi 0, %s72
      %s90 = sphi 0, %s90
      %s92 = sphi 0, %s90
      %s93 = sphi 0, %s92
      %s107 = sphi 0, %s93
      %s111 = sphi 0, %s111
      %s113 = sphi 0, %s111
      %s114 = sphi 0, %s113
      %s128 = sphi 0, %s114
      %s134 = sphi 0, %s136
      %s137 = sphi 0, %s134
      %s138 = sphi 0, %s137
      %s154 = sphi 0, %s138
    $region4: #{tpu_custom_call.1} parent=1 // loop_header_branch
      %17 = sbr.rel (%p15) target = $region8
    $region5: #{tpu_custom_call.1} parent=1 // loop_body
      %s19 = ssub.s32 %s14, 1
      %s20 = ssub.s32 %s14, 2
      %s21 = sadd.s32 %s14, 1
      %s22 = ssub.s32 %s14, %s21
      %p23 = scmp.eq.s32.totalorder %s22, 0
      %s25 = sadd.s32 %s24, 1
      %s26 = scalar_select %p23, %s24, %s25
      %p29 = pneg %p23
      %p30 = scmp.eq.s32.totalorder %s14, 1
      %p31 = por %p29, %p30
      %p32 = scmp.ne.s32.totalorder %s24, %s27
      %p33 = scmp.eq.s32.totalorder %s14, 0
      %p34 = por %p32, %p33
      %p35 = scmp.ne.s32.totalorder %s24, %s27
      %p36 = scmp.eq.s32.totalorder %s19, 1
      %p37 = por %p35, %p36
      %p38 = scmp.ne.s32.totalorder %s27, %s28
      %p39 = scmp.eq.s32.totalorder %s19, 0
      %p40 = por %p38, %p39
      %p41 = scmp.ne.s32.totalorder %s27, %s28
      %p42 = scmp.eq.s32.totalorder %s20, 1
      %p43 = por %p41, %p42
      %p45 = scmp.ne.s32.totalorder %s28, %s44
      %p46 = scmp.eq.s32.totalorder %s20, 0
      %p47 = por %p45, %p46
      %s49 = sadd.s32 %s48, 1
      %p52 = scmp.eq.s32.totalorder %s14, 1
      %p53 = scmp.ne.s32.totalorder %s48, %s50
      %p54 = scmp.eq.s32.totalorder %s14, 0
      %p55 = por %p53, %p54
      %p56 = scmp.ne.s32.totalorder %s48, %s50
      %p57 = scmp.eq.s32.totalorder %s19, 1
      %p58 = por %p56, %p57
      %p59 = scmp.ne.s32.totalorder %s50, %s51
      %p60 = scmp.eq.s32.totalorder %s19, 0
      %p61 = por %p59, %p60
      %p62 = scmp.ne.s32.totalorder %s50, %s51
      %p63 = scmp.eq.s32.totalorder %s20, 1
      %p64 = por %p62, %p63
      %p66 = scmp.ne.s32.totalorder %s51, %s65
      %p67 = scmp.eq.s32.totalorder %s20, 0
      %p68 = por %p66, %p67
      %s70 = sadd.s32 %s69, 1
      %p73 = scmp.eq.s32.totalorder %s14, 1
      %p74 = scmp.ne.s32.totalorder %s69, %s71
      %p75 = scmp.eq.s32.totalorder %s14, 0
      %p76 = por %p74, %p75
      %p77 = scmp.ne.s32.totalorder %s69, %s71
      %p78 = scmp.eq.s32.totalorder %s19, 1
      %p79 = por %p77, %p78
      %p80 = scmp.ne.s32.totalorder %s71, %s72
      %p81 = scmp.eq.s32.totalorder %s19, 0
      %p82 = por %p80, %p81
      %p83 = scmp.ne.s32.totalorder %s71, %s72
      %p84 = scmp.eq.s32.totalorder %s20, 1
      %p85 = por %p83, %p84
      %p87 = scmp.ne.s32.totalorder %s72, %s86
      %p88 = scmp.eq.s32.totalorder %s20, 0
      %p89 = por %p87, %p88
      %s91 = sadd.s32 %s90, 1
      %p94 = scmp.eq.s32.totalorder %s14, 1
      %p95 = scmp.ne.s32.totalorder %s90, %s92
      %p96 = scmp.eq.s32.totalorder %s14, 0
      %p97 = por %p95, %p96
      %p98 = scmp.ne.s32.totalorder %s90, %s92
      %p99 = scmp.eq.s32.totalorder %s19, 1
      %p100 = por %p98, %p99
      %p101 = scmp.ne.s32.totalorder %s92, %s93
      %p102 = scmp.eq.s32.totalorder %s19, 0
      %p103 = por %p101, %p102
      %p104 = scmp.ne.s32.totalorder %s92, %s93
      %p105 = scmp.eq.s32.totalorder %s20, 1
      %p106 = por %p104, %p105
      %p108 = scmp.ne.s32.totalorder %s93, %s107
      %p109 = scmp.eq.s32.totalorder %s20, 0
      %p110 = por %p108, %p109
      %s112 = sadd.s32 %s111, 1
      %p115 = scmp.eq.s32.totalorder %s14, 1
      %p116 = scmp.ne.s32.totalorder %s111, %s113
      %p117 = scmp.eq.s32.totalorder %s14, 0
      %p118 = por %p116, %p117
      %p119 = scmp.ne.s32.totalorder %s111, %s113
      %p120 = scmp.eq.s32.totalorder %s19, 1
      %p121 = por %p119, %p120
      %p122 = scmp.ne.s32.totalorder %s113, %s114
      %p123 = scmp.eq.s32.totalorder %s19, 0
      %p124 = por %p122, %p123
      %p125 = scmp.ne.s32.totalorder %s113, %s114
      %p126 = scmp.eq.s32.totalorder %s20, 1
      %p127 = por %p125, %p126
      %p129 = scmp.ne.s32.totalorder %s114, %s128
      %p130 = scmp.eq.s32.totalorder %s20, 0
      %p131 = por %p129, %p130
      %s132 = ssub.s32 %s14, %s21
      %p133 = scmp.eq.s32.totalorder %s132, 0
      %s135 = sadd.s32 %s134, 1
      %s136 = scalar_select %p133, %s134, %s135
      %p139 = pneg %p133
      %p140 = scmp.eq.s32.totalorder %s14, 1
      %p141 = por %p139, %p140
      %p142 = scmp.ne.s32.totalorder %s134, %s137
      %p143 = scmp.eq.s32.totalorder %s14, 0
      %p144 = por %p142, %p143
      %p145 = scmp.ne.s32.totalorder %s134, %s137
      %p146 = scmp.eq.s32.totalorder %s19, 1
      %p147 = por %p145, %p146
      %p148 = scmp.ne.s32.totalorder %s137, %s138
      %p149 = scmp.eq.s32.totalorder %s19, 0
      %p150 = por %p148, %p149
      %p151 = scmp.ne.s32.totalorder %s137, %s138
      %p152 = scmp.eq.s32.totalorder %s20, 1
      %p153 = por %p151, %p152
      %p155 = scmp.ne.s32.totalorder %s138, %s154
      %p156 = scmp.eq.s32.totalorder %s20, 0
      %p157 = por %p155, %p156
      %p158 = scmp.le.s32.totalorder 1, %s14
      %p159 = scmp.lt.s32.totalorder %s14, 3
      %p160 = pnand %p158, %p159
      %p161 = pneg %p160
      // Predicated region
      $region9: #{tpu_custom_call.1} parent=5 // pred_check
        _
      $region10: #{tpu_custom_call.1} parent=5 // pred_check_branch
        %163 = sbr.rel (%p160) target = $region12
      $region11: #{tpu_custom_call.1} parent=5 // pred_region
        %s164 = ssub.s32 %s14, 1
        // Predicated region
        $region13: #{tpu_custom_call.1} parent=11 // pred_check
          %p165 = pneg %p61
        $region14: #{tpu_custom_call.1} parent=11 // pred_check_branch
          %167 = sbr.rel (%p165) target = $region16
        $region15: #{tpu_custom_call.1} parent=11 // pred_region
          _
        $region16: #{tpu_custom_call.1} parent=11 // pred_fallthru
          _
        // Predicated region
        $region17: #{tpu_custom_call.1} parent=11 // pred_check
          %p168 = pneg %p82
        $region18: #{tpu_custom_call.1} parent=11 // pred_check_branch
          %170 = sbr.rel (%p168) target = $region20
        $region19: #{tpu_custom_call.1} parent=11 // pred_region
          _
        $region20: #{tpu_custom_call.1} parent=11 // pred_fallthru
          _
        // Predicated region
        $region21: #{tpu_custom_call.1} parent=11 // pred_check
          %p171 = pneg %p103
        $region22: #{tpu_custom_call.1} parent=11 // pred_check_branch
          %173 = sbr.rel (%p171) target = $region24
        $region23: #{tpu_custom_call.1} parent=11 // pred_region
          _
        $region24: #{tpu_custom_call.1} parent=11 // pred_fallthru
          _
        // Predicated region
        $region25: #{tpu_custom_call.1} parent=11 // pred_check
          %p174 = pneg %p124
        $region26: #{tpu_custom_call.1} parent=11 // pred_check_branch
          %176 = sbr.rel (%p174) target = $region28
        $region27: #{tpu_custom_call.1} parent=11 // pred_region
          _
        $region28: #{tpu_custom_call.1} parent=11 // pred_fallthru
          _
      $region12: #{tpu_custom_call.1} parent=5 // pred_fallthru
        _
      %p177 = scmp.lt.s32.totalorder %s14, 2
      // Predicated region
      $region29: #{tpu_custom_call.1} parent=5 // pred_check
        %p178 = pneg %p177
      $region30: #{tpu_custom_call.1} parent=5 // pred_check_branch
        %180 = sbr.rel (%p178) target = $region32
      $region31: #{tpu_custom_call.1} parent=5 // pred_region
        // Predicated region
        $region33: #{tpu_custom_call.1} parent=31 // pred_check
          %p181 = pneg %p34
        $region34: #{tpu_custom_call.1} parent=31 // pred_check_branch
          %183 = sbr.rel (%p181) target = $region36
        $region35: #{tpu_custom_call.1} parent=31 // pred_region
          %p184 = scmp.lt.s32.totalorder %s14, 1
          %s185 = scalar_select %p184, %s14, 1
          %s186 = smul.addr %s185, 16
          %s187 = smul.addr %s186, 8
          %s188 = scalar_lea.vmem %s0, %s187
        $region36: #{tpu_custom_call.1} parent=31 // pred_fallthru
          _
      $region32: #{tpu_custom_call.1} parent=5 // pred_fallthru
        _
      %p189 = scmp.le.s32.totalorder 1, %s14
      %p190 = scmp.lt.s32.totalorder %s14, 3
      %p191 = pnand %p189, %p190
      %p192 = pneg %p191
      // Predicated region
      $region37: #{tpu_custom_call.1} parent=5 // pred_check
        _
      $region38: #{tpu_custom_call.1} parent=5 // pred_check_branch
        %194 = sbr.rel (%p191) target = $region40
      $region39: #{tpu_custom_call.1} parent=5 // pred_region
        %s195 = ssub.s32 %s14, 1
        %p196 = scmp.lt.s32.totalorder %s19, 1
        %s197 = scalar_select %p196, %s19, 1
        %s198 = smul.addr %s197, 16
        %s199 = smul.addr %s198, 8
        %s200 = scalar_lea.vmem %s0, %s199
        %p201 = pneg %p40
        %p202 = pneg %p37
        %p203 = pneg %p61
        %p204 = pneg %p58
        %p205 = pneg %p82
        %p206 = pneg %p79
        %p207 = pneg %p103
        %p208 = pneg %p100
        %p209 = pneg %p124
        %p210 = pneg %p121
        %p211 = pneg %p150
        %p212 = pneg %p147
        %s213 = sand.u32 %s137, 1
        %s214 = scalar_lea.sflag [#allocation3], %s213
        %s215 = sand.u32 %s137, 1
        %s216 = smul.addr %s215, 128
        %s217 = scalar_lea.vmem [#allocation2], %s216
        %p218 = scmp.lt.s32.totalorder %s19, 1
        %s219 = scalar_select %p218, %s19, 1
        %s220 = smul.addr %s219, 16
        %s221 = smul.addr %s220, 8
        %s222 = scalar_lea.vmem %s0, %s221
        %v223 = vld [vmem:[%s222] sm:$0xff]
        %v224 = vld [vmem:[%s222 + $0x8] sm:$0xff]
        %v225 = vld [vmem:[%s222 + $0x10] sm:$0xff]
        %v226 = vld [vmem:[%s222 + $0x18] sm:$0xff]
        %v227 = vld [vmem:[%s222 + $0x20] sm:$0xff]
        %v228 = vld [vmem:[%s222 + $0x28] sm:$0xff]
        %v229 = vld [vmem:[%s222 + $0x30] sm:$0xff]
        %v230 = vld [vmem:[%s222 + $0x38] sm:$0xff]
        %v231 = vld [vmem:[%s222 + $0x40] sm:$0xff]
        %v232 = vld [vmem:[%s222 + $0x48] sm:$0xff]
        %v233 = vld [vmem:[%s222 + $0x50] sm:$0xff]
        %v234 = vld [vmem:[%s222 + $0x58] sm:$0xff]
        %v235 = vld [vmem:[%s222 + $0x60] sm:$0xff]
        %v236 = vld [vmem:[%s222 + $0x68] sm:$0xff]
        %v237 = vld [vmem:[%s222 + $0x70] sm:$0xff]
        %v238 = vld [vmem:[%s222 + $0x78] sm:$0xff]
        %v239 = vadd.f32 %v223, %v231
        %v240 = vrot.slane %v239, 4
        %v241 = vadd.f32 %v239, %v240
        %v242 = vrot.slane %v241, 2
        %v243 = vadd.f32 %v241, %v242
        %v244 = vrot.slane %v243, 1
        %v245 = vadd.f32 %v243, %v244
        %v246 = vadd.f32 %v224, %v232
        %v247 = vrot.slane %v246, 4
        %v248 = vadd.f32 %v246, %v247
        %v249 = vrot.slane %v248, 2
        %v250 = vadd.f32 %v248, %v249
        %v251 = vrot.slane %v250, 1
        %v252 = vadd.f32 %v250, %v251
        %v253 = vadd.f32 %v225, %v233
        %v254 = vrot.slane %v253, 4
        %v255 = vadd.f32 %v253, %v254
        %v256 = vrot.slane %v255, 2
        %v257 = vadd.f32 %v255, %v256
        %v258 = vrot.slane %v257, 1
        %v259 = vadd.f32 %v257, %v258
        %v260 = vadd.f32 %v226, %v234
        %v261 = vrot.slane %v260, 4
        %v262 = vadd.f32 %v260, %v261
        %v263 = vrot.slane %v262, 2
        %v264 = vadd.f32 %v262, %v263
        %v265 = vrot.slane %v264, 1
        %v266 = vadd.f32 %v264, %v265
        %v267 = vadd.f32 %v227, %v235
        %v268 = vrot.slane %v267, 4
        %v269 = vadd.f32 %v267, %v268
        %v270 = vrot.slane %v269, 2
        %v271 = vadd.f32 %v269, %v270
        %v272 = vrot.slane %v271, 1
        %v273 = vadd.f32 %v271, %v272
        %v274 = vadd.f32 %v228, %v236
        %v275 = vrot.slane %v274, 4
        %v276 = vadd.f32 %v274, %v275
        %v277 = vrot.slane %v276, 2
        %v278 = vadd.f32 %v276, %v277
        %v279 = vrot.slane %v278, 1
        %v280 = vadd.f32 %v278, %v279
        %v281 = vadd.f32 %v229, %v237
        %v282 = vrot.slane %v281, 4
        %v283 = vadd.f32 %v281, %v282
        %v284 = vrot.slane %v283, 2
        %v285 = vadd.f32 %v283, %v284
        %v286 = vrot.slane %v285, 1
        %v287 = vadd.f32 %v285, %v286
        %v288 = vadd.f32 %v230, %v238
        %v289 = vrot.slane %v288, 4
        %v290 = vadd.f32 %v288, %v289
        %v291 = vrot.slane %v290, 2
        %v292 = vadd.f32 %v290, %v291
        %v293 = vrot.slane %v292, 1
        %v294 = vadd.f32 %v292, %v293
        %v295 = vmul.f32 %v245, 0.00390625
        %v296 = vmul.f32 %v252, 0.00390625
        %v297 = vmul.f32 %v259, 0.00390625
        %v298 = vmul.f32 %v266, 0.00390625
        %v299 = vmul.f32 %v273, 0.00390625
        %v300 = vmul.f32 %v280, 0.00390625
        %v301 = vmul.f32 %v287, 0.00390625
        %v302 = vmul.f32 %v294, 0.00390625
        %v303 = vld [vmem:[%s1] sm:$0xff]
        %v304 = vld [vmem:[%s1 + $0x8] sm:$0xff]
        %v305 = vld [vmem:[%s1 + $0x10] sm:$0xff]
        %v306 = vld [vmem:[%s1 + $0x18] sm:$0xff]
        %v307 = vld [vmem:[%s1 + $0x20] sm:$0xff]
        %v308 = vld [vmem:[%s1 + $0x28] sm:$0xff]
        %v309 = vld [vmem:[%s1 + $0x30] sm:$0xff]
        %v310 = vld [vmem:[%s1 + $0x38] sm:$0xff]
        %v311 = vld [vmem:[%s1 + $0x40] sm:$0xff]
        %v312 = vld [vmem:[%s1 + $0x48] sm:$0xff]
        %v313 = vld [vmem:[%s1 + $0x50] sm:$0xff]
        %v314 = vld [vmem:[%s1 + $0x58] sm:$0xff]
        %v315 = vld [vmem:[%s1 + $0x60] sm:$0xff]
        %v316 = vld [vmem:[%s1 + $0x68] sm:$0xff]
        %v317 = vld [vmem:[%s1 + $0x70] sm:$0xff]
        %v318 = vld [vmem:[%s1 + $0x78] sm:$0xff]
        %v319 = vld [vmem:[%s1 + $0x80] sm:$0xff]
        %v320 = vld [vmem:[%s1 + $0x88] sm:$0xff]
        %v321 = vld [vmem:[%s1 + $0x90] sm:$0xff]
        %v322 = vld [vmem:[%s1 + $0x98] sm:$0xff]
        %v323 = vld [vmem:[%s1 + $0xa0] sm:$0xff]
        %v324 = vld [vmem:[%s1 + $0xa8] sm:$0xff]
        %v325 = vld [vmem:[%s1 + $0xb0] sm:$0xff]
        %v326 = vld [vmem:[%s1 + $0xb8] sm:$0xff]
        %v327 = vld [vmem:[%s1 + $0xc0] sm:$0xff]
        %v328 = vld [vmem:[%s1 + $0xc8] sm:$0xff]
        %v329 = vld [vmem:[%s1 + $0xd0] sm:$0xff]
        %v330 = vld [vmem:[%s1 + $0xd8] sm:$0xff]
        %v331 = vld [vmem:[%s1 + $0xe0] sm:$0xff]
        %v332 = vld [vmem:[%s1 + $0xe8] sm:$0xff]
        %v333 = vld [vmem:[%s1 + $0xf0] sm:$0xff]
        %v334 = vld [vmem:[%s1 + $0xf8] sm:$0xff]
        %v335 = vld [vmem:[%s1 + $0x100] sm:$0xff]
        %v336 = vld [vmem:[%s1 + $0x108] sm:$0xff]
        %v337 = vld [vmem:[%s1 + $0x110] sm:$0xff]
        %v338 = vld [vmem:[%s1 + $0x118] sm:$0xff]
        %v339 = vld [vmem:[%s1 + $0x120] sm:$0xff]
        %v340 = vld [vmem:[%s1 + $0x128] sm:$0xff]
        %v341 = vld [vmem:[%s1 + $0x130] sm:$0xff]
        %v342 = vld [vmem:[%s1 + $0x138] sm:$0xff]
        %v343 = vld [vmem:[%s1 + $0x140] sm:$0xff]
        %v344 = vld [vmem:[%s1 + $0x148] sm:$0xff]
        %v345 = vld [vmem:[%s1 + $0x150] sm:$0xff]
        %v346 = vld [vmem:[%s1 + $0x158] sm:$0xff]
        %v347 = vld [vmem:[%s1 + $0x160] sm:$0xff]
        %v348 = vld [vmem:[%s1 + $0x168] sm:$0xff]
        %v349 = vld [vmem:[%s1 + $0x170] sm:$0xff]
        %v350 = vld [vmem:[%s1 + $0x178] sm:$0xff]
        %v351 = vld [vmem:[%s1 + $0x180] sm:$0xff]
        %v352 = vld [vmem:[%s1 + $0x188] sm:$0xff]
        %v353 = vld [vmem:[%s1 + $0x190] sm:$0xff]
        %v354 = vld [vmem:[%s1 + $0x198] sm:$0xff]
        %v355 = vld [vmem:[%s1 + $0x1a0] sm:$0xff]
        %v356 = vld [vmem:[%s1 + $0x1a8] sm:$0xff]
        %v357 = vld [vmem:[%s1 + $0x1b0] sm:$0xff]
        %v358 = vld [vmem:[%s1 + $0x1b8] sm:$0xff]
        %v359 = vld [vmem:[%s1 + $0x1c0] sm:$0xff]
        %v360 = vld [vmem:[%s1 + $0x1c8] sm:$0xff]
        %v361 = vld [vmem:[%s1 + $0x1d0] sm:$0xff]
        %v362 = vld [vmem:[%s1 + $0x1d8] sm:$0xff]
        %v363 = vld [vmem:[%s1 + $0x1e0] sm:$0xff]
        %v364 = vld [vmem:[%s1 + $0x1e8] sm:$0xff]
        %v365 = vld [vmem:[%s1 + $0x1f0] sm:$0xff]
        %v366 = vld [vmem:[%s1 + $0x1f8] sm:$0xff]
        %v367 = vld [vmem:[%s1 + $0x200] sm:$0xff]
        %v368 = vld [vmem:[%s1 + $0x208] sm:$0xff]
        %v369 = vld [vmem:[%s1 + $0x210] sm:$0xff]
        %v370 = vld [vmem:[%s1 + $0x218] sm:$0xff]
        %v371 = vld [vmem:[%s1 + $0x220] sm:$0xff]
        %v372 = vld [vmem:[%s1 + $0x228] sm:$0xff]
        %v373 = vld [vmem:[%s1 + $0x230] sm:$0xff]
        %v374 = vld [vmem:[%s1 + $0x238] sm:$0xff]
        %v375 = vld [vmem:[%s1 + $0x240] sm:$0xff]
        %v376 = vld [vmem:[%s1 + $0x248] sm:$0xff]
        %v377 = vld [vmem:[%s1 + $0x250] sm:$0xff]
        %v378 = vld [vmem:[%s1 + $0x258] sm:$0xff]
        %v379 = vld [vmem:[%s1 + $0x260] sm:$0xff]
        %v380 = vld [vmem:[%s1 + $0x268] sm:$0xff]
        %v381 = vld [vmem:[%s1 + $0x270] sm:$0xff]
        %v382 = vld [vmem:[%s1 + $0x278] sm:$0xff]
        %v383 = vld [vmem:[%s1 + $0x280] sm:$0xff]
        %v384 = vld [vmem:[%s1 + $0x288] sm:$0xff]
        %v385 = vld [vmem:[%s1 + $0x290] sm:$0xff]
        %v386 = vld [vmem:[%s1 + $0x298] sm:$0xff]
        %v387 = vld [vmem:[%s1 + $0x2a0] sm:$0xff]
        %v388 = vld [vmem:[%s1 + $0x2a8] sm:$0xff]
        %v389 = vld [vmem:[%s1 + $0x2b0] sm:$0xff]
        %v390 = vld [vmem:[%s1 + $0x2b8] sm:$0xff]
        %v391 = vld [vmem:[%s1 + $0x2c0] sm:$0xff]
        %v392 = vld [vmem:[%s1 + $0x2c8] sm:$0xff]
        %v393 = vld [vmem:[%s1 + $0x2d0] sm:$0xff]
        %v394 = vld [vmem:[%s1 + $0x2d8] sm:$0xff]
        %v395 = vld [vmem:[%s1 + $0x2e0] sm:$0xff]
        %v396 = vld [vmem:[%s1 + $0x2e8] sm:$0xff]
        %v397 = vld [vmem:[%s1 + $0x2f0] sm:$0xff]
        %v398 = vld [vmem:[%s1 + $0x2f8] sm:$0xff]
        %v399 = vld [vmem:[%s1 + $0x300] sm:$0xff]
        %v400 = vld [vmem:[%s1 + $0x308] sm:$0xff]
        %v401 = vld [vmem:[%s1 + $0x310] sm:$0xff]
        %v402 = vld [vmem:[%s1 + $0x318] sm:$0xff]
        %v403 = vld [vmem:[%s1 + $0x320] sm:$0xff]
        %v404 = vld [vmem:[%s1 + $0x328] sm:$0xff]
        %v405 = vld [vmem:[%s1 + $0x330] sm:$0xff]
        %v406 = vld [vmem:[%s1 + $0x338] sm:$0xff]
        %v407 = vld [vmem:[%s1 + $0x340] sm:$0xff]
        %v408 = vld [vmem:[%s1 + $0x348] sm:$0xff]
        %v409 = vld [vmem:[%s1 + $0x350] sm:$0xff]
        %v410 = vld [vmem:[%s1 + $0x358] sm:$0xff]
        %v411 = vld [vmem:[%s1 + $0x360] sm:$0xff]
        %v412 = vld [vmem:[%s1 + $0x368] sm:$0xff]
        %v413 = vld [vmem:[%s1 + $0x370] sm:$0xff]
        %v414 = vld [vmem:[%s1 + $0x378] sm:$0xff]
        %v415 = vld [vmem:[%s1 + $0x380] sm:$0xff]
        %v416 = vld [vmem:[%s1 + $0x388] sm:$0xff]
        %v417 = vld [vmem:[%s1 + $0x390] sm:$0xff]
        %v418 = vld [vmem:[%s1 + $0x398] sm:$0xff]
        %v419 = vld [vmem:[%s1 + $0x3a0] sm:$0xff]
        %v420 = vld [vmem:[%s1 + $0x3a8] sm:$0xff]
        %v421 = vld [vmem:[%s1 + $0x3b0] sm:$0xff]
        %v422 = vld [vmem:[%s1 + $0x3b8] sm:$0xff]
        %v423 = vld [vmem:[%s1 + $0x3c0] sm:$0xff]
        %v424 = vld [vmem:[%s1 + $0x3c8] sm:$0xff]
        %v425 = vld [vmem:[%s1 + $0x3d0] sm:$0xff]
        %v426 = vld [vmem:[%s1 + $0x3d8] sm:$0xff]
        %v427 = vld [vmem:[%s1 + $0x3e0] sm:$0xff]
        %v428 = vld [vmem:[%s1 + $0x3e8] sm:$0xff]
        %v429 = vld [vmem:[%s1 + $0x3f0] sm:$0xff]
        %v430 = vld [vmem:[%s1 + $0x3f8] sm:$0xff]
        %v431 = vld [vmem:[%s2] sm:$0x1]
        %432 = vmatprep.subr.mxu0 0.0
        %433 = vmatpush1.msra.mxu0 %v303
        %434 = vmatprep.subr.mxu0 0.0
        %435 = vmatpush1.msra.mxu0 %v304
        %436 = vmatprep.subr.mxu0 0.0
        %437 = vmatpush1.msra.mxu0 %v305
        %438 = vmatprep.subr.mxu0 0.0
        %439 = vmatpush1.msra.mxu0 %v306
        %440 = vmatprep.subr.mxu0 0.0
        %441 = vmatpush1.msra.mxu0 %v307
        %442 = vmatprep.subr.mxu0 0.0
        %443 = vmatpush1.msra.mxu0 %v308
        %444 = vmatprep.subr.mxu0 0.0
        %445 = vmatpush1.msra.mxu0 %v309
        %446 = vmatprep.subr.mxu0 0.0
        %447 = vmatpush1.msra.mxu0 %v310
        %448 = vmatprep.subr.mxu0 0.0
        %449 = vmatpush1.msra.mxu0 %v311
        %450 = vmatprep.subr.mxu0 0.0
        %451 = vmatpush1.msra.mxu0 %v312
        %452 = vmatprep.subr.mxu0 0.0
        %453 = vmatpush1.msra.mxu0 %v313
        %454 = vmatprep.subr.mxu0 0.0
        %455 = vmatpush1.msra.mxu0 %v314
        %456 = vmatprep.subr.mxu0 0.0
        %457 = vmatpush1.msra.mxu0 %v315
        %458 = vmatprep.subr.mxu0 0.0
        %459 = vmatpush1.msra.mxu0 %v316
        %460 = vmatprep.subr.mxu0 0.0
        %461 = vmatpush1.msra.mxu0 %v317
        %462 = vmatprep.subr.mxu0 0.0
        %463 = vmatpush1.msra.mxu0 %v318
        %464 = vmatprep.subr.mxu0 0.0
        %465 = vmatpush1.msra.mxu0 %v319
        %466 = vmatprep.subr.mxu0 0.0
        %467 = vmatpush1.msra.mxu0 %v320
        %468 = vmatprep.subr.mxu0 0.0
        %469 = vmatpush1.msra.mxu0 %v321
        %470 = vmatprep.subr.mxu0 0.0
        %471 = vmatpush1.msra.mxu0 %v322
        %472 = vmatprep.subr.mxu0 0.0
        %473 = vmatpush1.msra.mxu0 %v323
        %474 = vmatprep.subr.mxu0 0.0
        %475 = vmatpush1.msra.mxu0 %v324
        %476 = vmatprep.subr.mxu0 0.0
        %477 = vmatpush1.msra.mxu0 %v325
        %478 = vmatprep.subr.mxu0 0.0
        %479 = vmatpush1.msra.mxu0 %v326
        %480 = vmatprep.subr.mxu0 0.0
        %481 = vmatpush1.msra.mxu0 %v327
        %482 = vmatprep.subr.mxu0 0.0
        %483 = vmatpush1.msra.mxu0 %v328
        %484 = vmatprep.subr.mxu0 0.0
        %485 = vmatpush1.msra.mxu0 %v329
        %486 = vmatprep.subr.mxu0 0.0
        %487 = vmatpush1.msra.mxu0 %v330
        %488 = vmatprep.subr.mxu0 0.0
        %489 = vmatpush1.msra.mxu0 %v331
        %490 = vmatprep.subr.mxu0 0.0
        %491 = vmatpush1.msra.mxu0 %v332
        %492 = vmatprep.subr.mxu0 0.0
        %493 = vmatpush1.msra.mxu0 %v333
        %494 = vmatprep.subr.mxu0 0.0
        %495 = vmatpush1.msra.mxu0 %v334
        %496 = vmatprep.mubr.f32.mxu0 %v296
        %497 = vmatmul.mubr.f32.gmra.mrb[0].mxu0 %v295
        %v498 = vpop.f32.mrb[0].mxu0
        %v499 = vadd.f32 %v431, %v498
        %v500 = vpop.f32.mrb[0].mxu0
        %501 = vdwg.mxu0
        %502 = vmatprep.subr.mxu0 0.0
        %503 = vmatpush1.msra.mxu0 %v335
        %504 = vmatprep.subr.mxu0 0.0
        %505 = vmatpush1.msra.mxu0 %v336
        %506 = vmatprep.subr.mxu0 0.0
        %507 = vmatpush1.msra.mxu0 %v337
        %508 = vmatprep.subr.mxu0 0.0
        %509 = vmatpush1.msra.mxu0 %v338
        %510 = vmatprep.subr.mxu0 0.0
        %511 = vmatpush1.msra.mxu0 %v339
        %512 = vmatprep.subr.mxu0 0.0
        %513 = vmatpush1.msra.mxu0 %v340
        %514 = vmatprep.subr.mxu0 0.0
        %515 = vmatpush1.msra.mxu0 %v341
        %516 = vmatprep.subr.mxu0 0.0
        %517 = vmatpush1.msra.mxu0 %v342
        %518 = vmatprep.subr.mxu0 0.0
        %519 = vmatpush1.msra.mxu0 %v343
        %520 = vmatprep.subr.mxu0 0.0
        %521 = vmatpush1.msra.mxu0 %v344
        %522 = vmatprep.subr.mxu0 0.0
        %523 = vmatpush1.msra.mxu0 %v345
        %524 = vmatprep.subr.mxu0 0.0
        %525 = vmatpush1.msra.mxu0 %v346
        %526 = vmatprep.subr.mxu0 0.0
        %527 = vmatpush1.msra.mxu0 %v347
        %528 = vmatprep.subr.mxu0 0.0
        %529 = vmatpush1.msra.mxu0 %v348
        %530 = vmatprep.subr.mxu0 0.0
        %531 = vmatpush1.msra.mxu0 %v349
        %532 = vmatprep.subr.mxu0 0.0
        %533 = vmatpush1.msra.mxu0 %v350
        %534 = vmatprep.subr.mxu0 0.0
        %535 = vmatpush1.msra.mxu0 %v351
        %536 = vmatprep.subr.mxu0 0.0
        %537 = vmatpush1.msra.mxu0 %v352
        %538 = vmatprep.subr.mxu0 0.0
        %539 = vmatpush1.msra.mxu0 %v353
        %540 = vmatprep.subr.mxu0 0.0
        %541 = vmatpush1.msra.mxu0 %v354
        %542 = vmatprep.subr.mxu0 0.0
        %543 = vmatpush1.msra.mxu0 %v355
        %544 = vmatprep.subr.mxu0 0.0
        %545 = vmatpush1.msra.mxu0 %v356
        %546 = vmatprep.subr.mxu0 0.0
        %547 = vmatpush1.msra.mxu0 %v357
        %548 = vmatprep.subr.mxu0 0.0
        %549 = vmatpush1.msra.mxu0 %v358
        %550 = vmatprep.subr.mxu0 0.0
        %551 = vmatpush1.msra.mxu0 %v359
        %552 = vmatprep.subr.mxu0 0.0
        %553 = vmatpush1.msra.mxu0 %v360
        %554 = vmatprep.subr.mxu0 0.0
        %555 = vmatpush1.msra.mxu0 %v361
        %556 = vmatprep.subr.mxu0 0.0
        %557 = vmatpush1.msra.mxu0 %v362
        %558 = vmatprep.subr.mxu0 0.0
        %559 = vmatpush1.msra.mxu0 %v363
        %560 = vmatprep.subr.mxu0 0.0
        %561 = vmatpush1.msra.mxu0 %v364
        %562 = vmatprep.subr.mxu0 0.0
        %563 = vmatpush1.msra.mxu0 %v365
        %564 = vmatprep.subr.mxu0 0.0
        %565 = vmatpush1.msra.mxu0 %v366
        %566 = vmatprep.mubr.f32.mxu0 %v298
        %567 = vmatmul.mubr.f32.gmra.mrb[0].mxu0 %v297
        %v568 = vpop.f32.mrb[0].mxu0
        %v569 = vadd.f32 %v499, %v568
        %v570 = vpop.f32.mrb[0].mxu0
        %571 = vdwg.mxu0
        %572 = vmatprep.subr.mxu0 0.0
        %573 = vmatpush1.msra.mxu0 %v367
        %574 = vmatprep.subr.mxu0 0.0
        %575 = vmatpush1.msra.mxu0 %v368
        %576 = vmatprep.subr.mxu0 0.0
        %577 = vmatpush1.msra.mxu0 %v369
        %578 = vmatprep.subr.mxu0 0.0
        %579 = vmatpush1.msra.mxu0 %v370
        %580 = vmatprep.subr.mxu0 0.0
        %581 = vmatpush1.msra.mxu0 %v371
        %582 = vmatprep.subr.mxu0 0.0
        %583 = vmatpush1.msra.mxu0 %v372
        %584 = vmatprep.subr.mxu0 0.0
        %585 = vmatpush1.msra.mxu0 %v373
        %586 = vmatprep.subr.mxu0 0.0
        %587 = vmatpush1.msra.mxu0 %v374
        %588 = vmatprep.subr.mxu0 0.0
        %589 = vmatpush1.msra.mxu0 %v375
        %590 = vmatprep.subr.mxu0 0.0
        %591 = vmatpush1.msra.mxu0 %v376
        %592 = vmatprep.subr.mxu0 0.0
        %593 = vmatpush1.msra.mxu0 %v377
        %594 = vmatprep.subr.mxu0 0.0
        %595 = vmatpush1.msra.mxu0 %v378
        %596 = vmatprep.subr.mxu0 0.0
        %597 = vmatpush1.msra.mxu0 %v379
        %598 = vmatprep.subr.mxu0 0.0
        %599 = vmatpush1.msra.mxu0 %v380
        %600 = vmatprep.subr.mxu0 0.0
        %601 = vmatpush1.msra.mxu0 %v381
        %602 = vmatprep.subr.mxu0 0.0
        %603 = vmatpush1.msra.mxu0 %v382
        %604 = vmatprep.subr.mxu0 0.0
        %605 = vmatpush1.msra.mxu0 %v383
        %606 = vmatprep.subr.mxu0 0.0
        %607 = vmatpush1.msra.mxu0 %v384
        %608 = vmatprep.subr.mxu0 0.0
        %609 = vmatpush1.msra.mxu0 %v385
        %610 = vmatprep.subr.mxu0 0.0
        %611 = vmatpush1.msra.mxu0 %v386
        %612 = vmatprep.subr.mxu0 0.0
        %613 = vmatpush1.msra.mxu0 %v387
        %614 = vmatprep.subr.mxu0 0.0
        %615 = vmatpush1.msra.mxu0 %v388
        %616 = vmatprep.subr.mxu0 0.0
        %617 = vmatpush1.msra.mxu0 %v389
        %618 = vmatprep.subr.mxu0 0.0
        %619 = vmatpush1.msra.mxu0 %v390
        %620 = vmatprep.subr.mxu0 0.0
        %621 = vmatpush1.msra.mxu0 %v391
        %622 = vmatprep.subr.mxu0 0.0
        %623 = vmatpush1.msra.mxu0 %v392
        %624 = vmatprep.subr.mxu0 0.0
        %625 = vmatpush1.msra.mxu0 %v393
        %626 = vmatprep.subr.mxu0 0.0
        %627 = vmatpush1.msra.mxu0 %v394
        %628 = vmatprep.subr.mxu0 0.0
        %629 = vmatpush1.msra.mxu0 %v395
        %630 = vmatprep.subr.mxu0 0.0
        %631 = vmatpush1.msra.mxu0 %v396
        %632 = vmatprep.subr.mxu0 0.0
        %633 = vmatpush1.msra.mxu0 %v397
        %634 = vmatprep.subr.mxu0 0.0
        %635 = vmatpush1.msra.mxu0 %v398
        %636 = vmatprep.mubr.f32.mxu0 %v300
        %637 = vmatmul.mubr.f32.gmra.mrb[0].mxu0 %v299
        %v638 = vpop.f32.mrb[0].mxu0
        %v639 = vadd.f32 %v569, %v638
        %v640 = vpop.f32.mrb[0].mxu0
        %641 = vdwg.mxu0
        %642 = vmatprep.subr.mxu0 0.0
        %643 = vmatpush1.msra.mxu0 %v399
        %644 = vmatprep.subr.mxu0 0.0
        %645 = vmatpush1.msra.mxu0 %v400
        %646 = vmatprep.subr.mxu0 0.0
        %647 = vmatpush1.msra.mxu0 %v401
        %648 = vmatprep.subr.mxu0 0.0
        %649 = vmatpush1.msra.mxu0 %v402
        %650 = vmatprep.subr.mxu0 0.0
        %651 = vmatpush1.msra.mxu0 %v403
        %652 = vmatprep.subr.mxu0 0.0
        %653 = vmatpush1.msra.mxu0 %v404
        %654 = vmatprep.subr.mxu0 0.0
        %655 = vmatpush1.msra.mxu0 %v405
        %656 = vmatprep.subr.mxu0 0.0
        %657 = vmatpush1.msra.mxu0 %v406
        %658 = vmatprep.subr.mxu0 0.0
        %659 = vmatpush1.msra.mxu0 %v407
        %660 = vmatprep.subr.mxu0 0.0
        %661 = vmatpush1.msra.mxu0 %v408
        %662 = vmatprep.subr.mxu0 0.0
        %663 = vmatpush1.msra.mxu0 %v409
        %664 = vmatprep.subr.mxu0 0.0
        %665 = vmatpush1.msra.mxu0 %v410
        %666 = vmatprep.subr.mxu0 0.0
        %667 = vmatpush1.msra.mxu0 %v411
        %668 = vmatprep.subr.mxu0 0.0
        %669 = vmatpush1.msra.mxu0 %v412
        %670 = vmatprep.subr.mxu0 0.0
        %671 = vmatpush1.msra.mxu0 %v413
        %672 = vmatprep.subr.mxu0 0.0
        %673 = vmatpush1.msra.mxu0 %v414
        %674 = vmatprep.subr.mxu0 0.0
        %675 = vmatpush1.msra.mxu0 %v415
        %676 = vmatprep.subr.mxu0 0.0
        %677 = vmatpush1.msra.mxu0 %v416
        %678 = vmatprep.subr.mxu0 0.0
        %679 = vmatpush1.msra.mxu0 %v417
        %680 = vmatprep.subr.mxu0 0.0
        %681 = vmatpush1.msra.mxu0 %v418
        %682 = vmatprep.subr.mxu0 0.0
        %683 = vmatpush1.msra.mxu0 %v419
        %684 = vmatprep.subr.mxu0 0.0
        %685 = vmatpush1.msra.mxu0 %v420
        %686 = vmatprep.subr.mxu0 0.0
        %687 = vmatpush1.msra.mxu0 %v421
        %688 = vmatprep.subr.mxu0 0.0
        %689 = vmatpush1.msra.mxu0 %v422
        %690 = vmatprep.subr.mxu0 0.0
        %691 = vmatpush1.msra.mxu0 %v423
        %692 = vmatprep.subr.mxu0 0.0
        %693 = vmatpush1.msra.mxu0 %v424
        %694 = vmatprep.subr.mxu0 0.0
        %695 = vmatpush1.msra.mxu0 %v425
        %696 = vmatprep.subr.mxu0 0.0
        %697 = vmatpush1.msra.mxu0 %v426
        %698 = vmatprep.subr.mxu0 0.0
        %699 = vmatpush1.msra.mxu0 %v427
        %700 = vmatprep.subr.mxu0 0.0
        %701 = vmatpush1.msra.mxu0 %v428
        %702 = vmatprep.subr.mxu0 0.0
        %703 = vmatpush1.msra.mxu0 %v429
        %704 = vmatprep.subr.mxu0 0.0
        %705 = vmatpush1.msra.mxu0 %v430
        %706 = vmatprep.mubr.f32.mxu0 %v302
        %707 = vmatmul.mubr.f32.gmra.mrb[0].mxu0 %v301
        %v708 = vpop.f32.mrb[0].mxu0
        %v709 = vadd.f32 %v639, %v708
        %v710 = vpop.f32.mrb[0].mxu0
        %711 = vdwg.mxu0
        %v712 = vmax.f32 %v709, 0.0
        %v713 = vld [vmem:[%s3] sm:$0xff]
        %v714 = vld [vmem:[%s3 + $0x8] sm:$0xff]
        %v715 = vld [vmem:[%s3 + $0x10] sm:$0xff]
        %v716 = vld [vmem:[%s3 + $0x18] sm:$0xff]
        %v717 = vld [vmem:[%s3 + $0x20] sm:$0xff]
        %v718 = vld [vmem:[%s3 + $0x28] sm:$0xff]
        %v719 = vld [vmem:[%s3 + $0x30] sm:$0xff]
        %v720 = vld [vmem:[%s3 + $0x38] sm:$0xff]
        %v721 = vld [vmem:[%s4] sm:$0xff]
        %v723 = vlaneseq
        %v724 = vshrl.u32 %v723, 7
        %v725 = vsub.s32 0, %v724
        %v726 = vrot.slane %v721, %v725
        %v727 = vlaneseq
        %v728 = vshrl.u32 %v727, 7
        %v729 = vsub.s32 1, %v728
        %v730 = vrot.slane %v721, %v729
        %v731 = vlaneseq
        %v732 = vshrl.u32 %v731, 7
        %v733 = vsub.s32 2, %v732
        %v734 = vrot.slane %v721, %v733
        %v735 = vlaneseq
        %v736 = vshrl.u32 %v735, 7
        %v737 = vsub.s32 3, %v736
        %v738 = vrot.slane %v721, %v737
        %v739 = vlaneseq
        %v740 = vshrl.u32 %v739, 7
        %v741 = vsub.s32 4, %v740
        %v742 = vrot.slane %v721, %v741
        %v743 = vlaneseq
        %v744 = vshrl.u32 %v743, 7
        %v745 = vsub.s32 5, %v744
        %v746 = vrot.slane %v721, %v745
        %v747 = vlaneseq
        %v748 = vshrl.u32 %v747, 7
        %v749 = vsub.s32 6, %v748
        %v750 = vrot.slane %v721, %v749
        %v751 = vlaneseq
        %v752 = vshrl.u32 %v751, 7
        %v753 = vsub.s32 7, %v752
        %v754 = vrot.slane %v721, %v753
        %vm763 = vcmask 64512
        %v765 = vsel %vm763, %v712, 0
        %767 = vmatprep.subr.mxu0 %v714
        %768 = vmatpush1.msra.mxu0 %v713
        %769 = vmatprep.subr.mxu0 0.0
        %770 = vmatpush1.msra.mxu0 0.0
        %771 = vmatprep.subr.mxu0 0.0
        %772 = vmatpush1.msra.mxu0 0.0
        %773 = vmatprep.subr.mxu0 0.0
        %774 = vmatpush1.msra.mxu0 0.0
        %775 = vmatprep.subr.mxu0 0.0
        %776 = vmatpush1.msra.mxu0 0.0
        %777 = vmatprep.subr.mxu0 0.0
        %778 = vmatpush1.msra.mxu0 0.0
        %779 = vmatprep.subr.mxu0 0.0
        %780 = vmatpush1.msra.mxu0 0.0
        %781 = vmatprep.subr.mxu0 0.0
        %782 = vmatpush1.msra.mxu0 0.0
        %783 = vmatprep.subr.mxu0 0.0
        %784 = vmatpush1.msra.mxu0 0.0
        %785 = vmatprep.subr.mxu0 0.0
        %786 = vmatpush1.msra.mxu0 0.0
        %787 = vmatprep.subr.mxu0 0.0
        %788 = vmatpush1.msra.mxu0 0.0
        %789 = vmatprep.subr.mxu0 0.0
        %790 = vmatpush1.msra.mxu0 0.0
        %791 = vmatprep.subr.mxu0 0.0
        %792 = vmatpush1.msra.mxu0 0.0
        %793 = vmatprep.subr.mxu0 0.0
        %794 = vmatpush1.msra.mxu0 0.0
        %795 = vmatprep.subr.mxu0 0.0
        %796 = vmatpush1.msra.mxu0 0.0
        %797 = vmatprep.subr.mxu0 0.0
        %798 = vmatpush1.msra.mxu0 0.0
        %799 = vmatprep.subr.mxu0 0.0
        %800 = vmatpush1.msra.mxu0 0.0
        %801 = vmatprep.subr.mxu0 0.0
        %802 = vmatpush1.msra.mxu0 0.0
        %803 = vmatprep.subr.mxu0 0.0
        %804 = vmatpush1.msra.mxu0 0.0
        %805 = vmatprep.subr.mxu0 0.0
        %806 = vmatpush1.msra.mxu0 0.0
        %807 = vmatprep.subr.mxu0 0.0
        %808 = vmatpush1.msra.mxu0 0.0
        %809 = vmatprep.subr.mxu0 0.0
        %810 = vmatpush1.msra.mxu0 0.0
        %811 = vmatprep.subr.mxu0 0.0
        %812 = vmatpush1.msra.mxu0 0.0
        %813 = vmatprep.subr.mxu0 0.0
        %814 = vmatpush1.msra.mxu0 0.0
        %815 = vmatprep.subr.mxu0 0.0
        %816 = vmatpush1.msra.mxu0 0.0
        %817 = vmatprep.subr.mxu0 0.0
        %818 = vmatpush1.msra.mxu0 0.0
        %819 = vmatprep.subr.mxu0 0.0
        %820 = vmatpush1.msra.mxu0 0.0
        %821 = vmatprep.subr.mxu0 0.0
        %822 = vmatpush1.msra.mxu0 0.0
        %823 = vmatprep.subr.mxu0 0.0
        %824 = vmatpush1.msra.mxu0 0.0
        %825 = vmatprep.subr.mxu0 0.0
        %826 = vmatpush1.msra.mxu0 0.0
        %827 = vmatprep.subr.mxu0 0.0
        %828 = vmatpush1.msra.mxu0 0.0
        %829 = vmatprep.subr.mxu0 0.0
        %830 = vmatpush1.msra.mxu0 0.0
        %831 = vmatprep.mubr.f32.mxu0 0.0
        %832 = vmatmul.mubr.f32.gmra.mrb[0].mxu0 %v765
        %v833 = vpop.f32.mrb[0].mxu0
        %v834 = vadd.f32 %v726, %v833
        %v835 = vpop.f32.mrb[0].mxu0
        %v836 = vadd.f32 %v730, %v835
        %837 = vdwg.mxu0
        %838 = vmatprep.subr.mxu0 %v716
        %839 = vmatpush1.msra.mxu0 %v715
        %840 = vmatprep.subr.mxu0 0.0
        %841 = vmatpush1.msra.mxu0 0.0
        %842 = vmatprep.subr.mxu0 0.0
        %843 = vmatpush1.msra.mxu0 0.0
        %844 = vmatprep.subr.mxu0 0.0
        %845 = vmatpush1.msra.mxu0 0.0
        %846 = vmatprep.subr.mxu0 0.0
        %847 = vmatpush1.msra.mxu0 0.0
        %848 = vmatprep.subr.mxu0 0.0
        %849 = vmatpush1.msra.mxu0 0.0
        %850 = vmatprep.subr.mxu0 0.0
        %851 = vmatpush1.msra.mxu0 0.0
        %852 = vmatprep.subr.mxu0 0.0
        %853 = vmatpush1.msra.mxu0 0.0
        %854 = vmatprep.subr.mxu0 0.0
        %855 = vmatpush1.msra.mxu0 0.0
        %856 = vmatprep.subr.mxu0 0.0
        %857 = vmatpush1.msra.mxu0 0.0
        %858 = vmatprep.subr.mxu0 0.0
        %859 = vmatpush1.msra.mxu0 0.0
        %860 = vmatprep.subr.mxu0 0.0
        %861 = vmatpush1.msra.mxu0 0.0
        %862 = vmatprep.subr.mxu0 0.0
        %863 = vmatpush1.msra.mxu0 0.0
        %864 = vmatprep.subr.mxu0 0.0
        %865 = vmatpush1.msra.mxu0 0.0
        %866 = vmatprep.subr.mxu0 0.0
        %867 = vmatpush1.msra.mxu0 0.0
        %868 = vmatprep.subr.mxu0 0.0
        %869 = vmatpush1.msra.mxu0 0.0
        %870 = vmatprep.subr.mxu0 0.0
        %871 = vmatpush1.msra.mxu0 0.0
        %872 = vmatprep.subr.mxu0 0.0
        %873 = vmatpush1.msra.mxu0 0.0
        %874 = vmatprep.subr.mxu0 0.0
        %875 = vmatpush1.msra.mxu0 0.0
        %876 = vmatprep.subr.mxu0 0.0
        %877 = vmatpush1.msra.mxu0 0.0
        %878 = vmatprep.subr.mxu0 0.0
        %879 = vmatpush1.msra.mxu0 0.0
        %880 = vmatprep.subr.mxu0 0.0
        %881 = vmatpush1.msra.mxu0 0.0
        %882 = vmatprep.subr.mxu0 0.0
        %883 = vmatpush1.msra.mxu0 0.0
        %884 = vmatprep.subr.mxu0 0.0
        %885 = vmatpush1.msra.mxu0 0.0
        %886 = vmatprep.subr.mxu0 0.0
        %887 = vmatpush1.msra.mxu0 0.0
        %888 = vmatprep.subr.mxu0 0.0
        %889 = vmatpush1.msra.mxu0 0.0
        %890 = vmatprep.subr.mxu0 0.0
        %891 = vmatpush1.msra.mxu0 0.0
        %892 = vmatprep.subr.mxu0 0.0
        %893 = vmatpush1.msra.mxu0 0.0
        %894 = vmatprep.subr.mxu0 0.0
        %895 = vmatpush1.msra.mxu0 0.0
        %896 = vmatprep.subr.mxu0 0.0
        %897 = vmatpush1.msra.mxu0 0.0
        %898 = vmatprep.subr.mxu0 0.0
        %899 = vmatpush1.msra.mxu0 0.0
        %900 = vmatprep.subr.mxu0 0.0
        %901 = vmatpush1.msra.mxu0 0.0
        %902 = vmatprep.mubr.f32.mxu0 0.0
        %903 = vmatmul.mubr.f32.gmra.mrb[0].mxu0 %v765
        %v904 = vpop.f32.mrb[0].mxu0
        %v905 = vadd.f32 %v734, %v904
        %v906 = vpop.f32.mrb[0].mxu0
        %v907 = vadd.f32 %v738, %v906
        %908 = vdwg.mxu0
        %909 = vmatprep.subr.mxu0 %v718
        %910 = vmatpush1.msra.mxu0 %v717
        %911 = vmatprep.subr.mxu0 0.0
        %912 = vmatpush1.msra.mxu0 0.0
        %913 = vmatprep.subr.mxu0 0.0
        %914 = vmatpush1.msra.mxu0 0.0
        %915 = vmatprep.subr.mxu0 0.0
        %916 = vmatpush1.msra.mxu0 0.0
        %917 = vmatprep.subr.mxu0 0.0
        %918 = vmatpush1.msra.mxu0 0.0
        %919 = vmatprep.subr.mxu0 0.0
        %920 = vmatpush1.msra.mxu0 0.0
        %921 = vmatprep.subr.mxu0 0.0
        %922 = vmatpush1.msra.mxu0 0.0
        %923 = vmatprep.subr.mxu0 0.0
        %924 = vmatpush1.msra.mxu0 0.0
        %925 = vmatprep.subr.mxu0 0.0
        %926 = vmatpush1.msra.mxu0 0.0
        %927 = vmatprep.subr.mxu0 0.0
        %928 = vmatpush1.msra.mxu0 0.0
        %929 = vmatprep.subr.mxu0 0.0
        %930 = vmatpush1.msra.mxu0 0.0
        %931 = vmatprep.subr.mxu0 0.0
        %932 = vmatpush1.msra.mxu0 0.0
        %933 = vmatprep.subr.mxu0 0.0
        %934 = vmatpush1.msra.mxu0 0.0
        %935 = vmatprep.subr.mxu0 0.0
        %936 = vmatpush1.msra.mxu0 0.0
        %937 = vmatprep.subr.mxu0 0.0
        %938 = vmatpush1.msra.mxu0 0.0
        %939 = vmatprep.subr.mxu0 0.0
        %940 = vmatpush1.msra.mxu0 0.0
        %941 = vmatprep.subr.mxu0 0.0
        %942 = vmatpush1.msra.mxu0 0.0
        %943 = vmatprep.subr.mxu0 0.0
        %944 = vmatpush1.msra.mxu0 0.0
        %945 = vmatprep.subr.mxu0 0.0
        %946 = vmatpush1.msra.mxu0 0.0
        %947 = vmatprep.subr.mxu0 0.0
        %948 = vmatpush1.msra.mxu0 0.0
        %949 = vmatprep.subr.mxu0 0.0
        %950 = vmatpush1.msra.mxu0 0.0
        %951 = vmatprep.subr.mxu0 0.0
        %952 = vmatpush1.msra.mxu0 0.0
        %953 = vmatprep.subr.mxu0 0.0
        %954 = vmatpush1.msra.mxu0 0.0
        %955 = vmatprep.subr.mxu0 0.0
        %956 = vmatpush1.msra.mxu0 0.0
        %957 = vmatprep.subr.mxu0 0.0
        %958 = vmatpush1.msra.mxu0 0.0
        %959 = vmatprep.subr.mxu0 0.0
        %960 = vmatpush1.msra.mxu0 0.0
        %961 = vmatprep.subr.mxu0 0.0
        %962 = vmatpush1.msra.mxu0 0.0
        %963 = vmatprep.subr.mxu0 0.0
        %964 = vmatpush1.msra.mxu0 0.0
        %965 = vmatprep.subr.mxu0 0.0
        %966 = vmatpush1.msra.mxu0 0.0
        %967 = vmatprep.subr.mxu0 0.0
        %968 = vmatpush1.msra.mxu0 0.0
        %969 = vmatprep.subr.mxu0 0.0
        %970 = vmatpush1.msra.mxu0 0.0
        %971 = vmatprep.subr.mxu0 0.0
        %972 = vmatpush1.msra.mxu0 0.0
        %973 = vmatprep.mubr.f32.mxu0 0.0
        %974 = vmatmul.mubr.f32.gmra.mrb[0].mxu0 %v765
        %v975 = vpop.f32.mrb[0].mxu0
        %v976 = vadd.f32 %v742, %v975
        %v977 = vpop.f32.mrb[0].mxu0
        %v978 = vadd.f32 %v746, %v977
        %979 = vdwg.mxu0
        %980 = vmatprep.subr.mxu0 %v720
        %981 = vmatpush1.msra.mxu0 %v719
        %982 = vmatprep.subr.mxu0 0.0
        %983 = vmatpush1.msra.mxu0 0.0
        %984 = vmatprep.subr.mxu0 0.0
        %985 = vmatpush1.msra.mxu0 0.0
        %986 = vmatprep.subr.mxu0 0.0
        %987 = vmatpush1.msra.mxu0 0.0
        %988 = vmatprep.subr.mxu0 0.0
        %989 = vmatpush1.msra.mxu0 0.0
        %990 = vmatprep.subr.mxu0 0.0
        %991 = vmatpush1.msra.mxu0 0.0
        %992 = vmatprep.subr.mxu0 0.0
        %993 = vmatpush1.msra.mxu0 0.0
        %994 = vmatprep.subr.mxu0 0.0
        %995 = vmatpush1.msra.mxu0 0.0
        %996 = vmatprep.subr.mxu0 0.0
        %997 = vmatpush1.msra.mxu0 0.0
        %998 = vmatprep.subr.mxu0 0.0
        %999 = vmatpush1.msra.mxu0 0.0
        %1000 = vmatprep.subr.mxu0 0.0
        %1001 = vmatpush1.msra.mxu0 0.0
        %1002 = vmatprep.subr.mxu0 0.0
        %1003 = vmatpush1.msra.mxu0 0.0
        %1004 = vmatprep.subr.mxu0 0.0
        %1005 = vmatpush1.msra.mxu0 0.0
        %1006 = vmatprep.subr.mxu0 0.0
        %1007 = vmatpush1.msra.mxu0 0.0
        %1008 = vmatprep.subr.mxu0 0.0
        %1009 = vmatpush1.msra.mxu0 0.0
        %1010 = vmatprep.subr.mxu0 0.0
        %1011 = vmatpush1.msra.mxu0 0.0
        %1012 = vmatprep.subr.mxu0 0.0
        %1013 = vmatpush1.msra.mxu0 0.0
        %1014 = vmatprep.subr.mxu0 0.0
        %1015 = vmatpush1.msra.mxu0 0.0
        %1016 = vmatprep.subr.mxu0 0.0
        %1017 = vmatpush1.msra.mxu0 0.0
        %1018 = vmatprep.subr.mxu0 0.0
        %1019 = vmatpush1.msra.mxu0 0.0
        %1020 = vmatprep.subr.mxu0 0.0
        %1021 = vmatpush1.msra.mxu0 0.0
        %1022 = vmatprep.subr.mxu0 0.0
        %1023 = vmatpush1.msra.mxu0 0.0
        %1024 = vmatprep.subr.mxu0 0.0
        %1025 = vmatpush1.msra.mxu0 0.0
        %1026 = vmatprep.subr.mxu0 0.0
        %1027 = vmatpush1.msra.mxu0 0.0
        %1028 = vmatprep.subr.mxu0 0.0
        %1029 = vmatpush1.msra.mxu0 0.0
        %1030 = vmatprep.subr.mxu0 0.0
        %1031 = vmatpush1.msra.mxu0 0.0
        %1032 = vmatprep.subr.mxu0 0.0
        %1033 = vmatpush1.msra.mxu0 0.0
        %1034 = vmatprep.subr.mxu0 0.0
        %1035 = vmatpush1.msra.mxu0 0.0
        %1036 = vmatprep.subr.mxu0 0.0
        %1037 = vmatpush1.msra.mxu0 0.0
        %1038 = vmatprep.subr.mxu0 0.0
        %1039 = vmatpush1.msra.mxu0 0.0
        %1040 = vmatprep.subr.mxu0 0.0
        %1041 = vmatpush1.msra.mxu0 0.0
        %1042 = vmatprep.subr.mxu0 0.0
        %1043 = vmatpush1.msra.mxu0 0.0
        %1044 = vmatprep.mubr.f32.mxu0 0.0
        %1045 = vmatmul.mubr.f32.gmra.mrb[0].mxu0 %v765
        %v1046 = vpop.f32.mrb[0].mxu0
        %v1047 = vadd.f32 %v750, %v1046
        %v1048 = vpop.f32.mrb[0].mxu0
        %v1049 = vadd.f32 %v754, %v1048
        %1050 = vdwg.mxu0
        %v1051 = vadd.f32 %v834, 3.0
        %v1052 = vadd.f32 %v836, 3.0
        %v1053 = vadd.f32 %v905, 3.0
        %v1054 = vadd.f32 %v907, 3.0
        %v1055 = vadd.f32 %v976, 3.0
        %v1056 = vadd.f32 %v978, 3.0
        %v1057 = vadd.f32 %v1047, 3.0
        %v1058 = vadd.f32 %v1049, 3.0
        %v1059 = vmul.f32 %v1051, 0.16666667
        %v1060 = vmul.f32 %v1052, 0.16666667
        %v1061 = vmul.f32 %v1053, 0.16666667
        %v1062 = vmul.f32 %v1054, 0.16666667
        %v1063 = vmul.f32 %v1055, 0.16666667
        %v1064 = vmul.f32 %v1056, 0.16666667
        %v1065 = vmul.f32 %v1057, 0.16666667
        %v1066 = vmul.f32 %v1058, 0.16666667
        %v1067 = vmax.f32 %v1059, 0.0
        %v1068 = vmax.f32 %v1060, 0.0
        %v1069 = vmax.f32 %v1061, 0.0
        %v1070 = vmax.f32 %v1062, 0.0
        %v1071 = vmax.f32 %v1063, 0.0
        %v1072 = vmax.f32 %v1064, 0.0
        %v1073 = vmax.f32 %v1065, 0.0
        %v1074 = vmax.f32 %v1066, 0.0
        %v1075 = vmin.f32 %v1067, 1.0
        %v1076 = vmin.f32 %v1068, 1.0
        %v1077 = vmin.f32 %v1069, 1.0
        %v1078 = vmin.f32 %v1070, 1.0
        %v1079 = vmin.f32 %v1071, 1.0
        %v1080 = vmin.f32 %v1072, 1.0
        %v1081 = vmin.f32 %v1073, 1.0
        %v1082 = vmin.f32 %v1074, 1.0
        %v1083 = vlaneseq
        %v1084 = vshrl.u32 %v1083, 7
        %v1085 = vsub.s32 0, %v1084
        %v1086 = vrot.slane %v1075, %v1085
        %v1087 = vlaneseq
        %v1088 = vshrl.u32 %v1087, 7
        %v1089 = vsub.s32 0, %v1088
        %v1090 = vrot.slane %v1076, %v1089
        %v1091 = vlaneseq
        %v1092 = vshrl.u32 %v1091, 7
        %v1093 = vsub.s32 0, %v1092
        %v1094 = vrot.slane %v1077, %v1093
        %v1095 = vlaneseq
        %v1096 = vshrl.u32 %v1095, 7
        %v1097 = vsub.s32 0, %v1096
        %v1098 = vrot.slane %v1078, %v1097
        %v1099 = vlaneseq
        %v1100 = vshrl.u32 %v1099, 7
        %v1101 = vsub.s32 0, %v1100
        %v1102 = vrot.slane %v1079, %v1101
        %v1103 = vlaneseq
        %v1104 = vshrl.u32 %v1103, 7
        %v1105 = vsub.s32 0, %v1104
        %v1106 = vrot.slane %v1080, %v1105
        %v1107 = vlaneseq
        %v1108 = vshrl.u32 %v1107, 7
        %v1109 = vsub.s32 0, %v1108
        %v1110 = vrot.slane %v1081, %v1109
        %v1111 = vlaneseq
        %v1112 = vshrl.u32 %v1111, 7
        %v1113 = vsub.s32 0, %v1112
        %v1114 = vrot.slane %v1082, %v1113
        %v1115 = vmul.f32 %v223, %v1086
        %v1116 = vmul.f32 %v224, %v1090
        %v1117 = vmul.f32 %v225, %v1094
        %v1118 = vmul.f32 %v226, %v1098
        %v1119 = vmul.f32 %v227, %v1102
        %v1120 = vmul.f32 %v228, %v1106
        %v1121 = vmul.f32 %v229, %v1110
        %v1122 = vmul.f32 %v230, %v1114
        %v1123 = vmul.f32 %v231, %v1086
        %v1124 = vmul.f32 %v232, %v1090
        %v1125 = vmul.f32 %v233, %v1094
        %v1126 = vmul.f32 %v234, %v1098
        %v1127 = vmul.f32 %v235, %v1102
        %v1128 = vmul.f32 %v236, %v1106
        %v1129 = vmul.f32 %v237, %v1110
        %v1130 = vmul.f32 %v238, %v1114
        %1131 = vst [vmem:[%s217] sm:$0xff] %v1115
        %1132 = vst [vmem:[%s217 + $0x8] sm:$0xff] %v1116
        %1133 = vst [vmem:[%s217 + $0x10] sm:$0xff] %v1117
        %1134 = vst [vmem:[%s217 + $0x18] sm:$0xff] %v1118
        %1135 = vst [vmem:[%s217 + $0x20] sm:$0xff] %v1119
        %1136 = vst [vmem:[%s217 + $0x28] sm:$0xff] %v1120
        %1137 = vst [vmem:[%s217 + $0x30] sm:$0xff] %v1121
        %1138 = vst [vmem:[%s217 + $0x38] sm:$0xff] %v1122
        %1139 = vst [vmem:[%s217 + $0x40] sm:$0xff] %v1123
        %1140 = vst [vmem:[%s217 + $0x48] sm:$0xff] %v1124
        %1141 = vst [vmem:[%s217 + $0x50] sm:$0xff] %v1125
        %1142 = vst [vmem:[%s217 + $0x58] sm:$0xff] %v1126
        %1143 = vst [vmem:[%s217 + $0x60] sm:$0xff] %v1127
        %1144 = vst [vmem:[%s217 + $0x68] sm:$0xff] %v1128
        %1145 = vst [vmem:[%s217 + $0x70] sm:$0xff] %v1129
        %1146 = vst [vmem:[%s217 + $0x78] sm:$0xff] %v1130
        %s1147 = sand.u32 %s137, 1
        %s1148 = scalar_lea.sflag [#allocation3], %s1147
        %s1149 = sand.u32 %s137, 1
        %s1150 = smul.addr %s1149, 128
        %s1151 = scalar_lea.vmem [#allocation2], %s1150
        // Predicated region
        $region41: #{tpu_custom_call.1} parent=39 // pred_check
          %p1152 = pneg %p147
        $region42: #{tpu_custom_call.1} parent=39 // pred_check_branch
          %1154 = sbr.rel (%p1152) target = $region44
        $region43: #{tpu_custom_call.1} parent=39 // pred_region
          %s1156 = ssub.s32 2048, 2048
          %1157 = vsyncadd %s1148, %s1156
          %s1158 = smul.addr %s19, 16
          %s1159 = smul.addr %s1158, 128
          %s1160 = scalar_lea.hbm %s5, %s1159
          %s1161 = sshll.u32 %s1151, 4
          %s1162 = int_to_ptr.vmem [resolvable:$true] %s1161
          %1167 = dma.vmem_to_hbm [thread:$0]  %s1162, 2048, %s1160, %s1148, 1024, 1024, 64
        $region44: #{tpu_custom_call.1} parent=39 // pred_fallthru
          _
      $region40: #{tpu_custom_call.1} parent=5 // pred_fallthru
        _
      %p1168 = scmp.le.s32.totalorder 2, %s14
      // Predicated region
      $region45: #{tpu_custom_call.1} parent=5 // pred_check
        %p1169 = pneg %p1168
      $region46: #{tpu_custom_call.1} parent=5 // pred_check_branch
        %1171 = sbr.rel (%p1169) target = $region48
      $region47: #{tpu_custom_call.1} parent=5 // pred_region
        %s1172 = ssub.s32 %s14, 2
        // Predicated region
        $region49: #{tpu_custom_call.1} parent=47 // pred_check
          %p1173 = pneg %p153
        $region50: #{tpu_custom_call.1} parent=47 // pred_check_branch
          %1175 = sbr.rel (%p1173) target = $region52
        $region51: #{tpu_custom_call.1} parent=47 // pred_region
          %s1176 = sand.u32 %s138, 1
          %s1177 = scalar_lea.sflag [#allocation3], %s1176
          %s1178 = sand.u32 %s138, 1
          %s1179 = smul.addr %s1178, 128
          %s1180 = scalar_lea.vmem [#allocation2], %s1179
          %1181 = dma.done %s1177, 2048
        $region52: #{tpu_custom_call.1} parent=47 // pred_fallthru
          _
      $region48: #{tpu_custom_call.1} parent=5 // pred_fallthru
        _
    $region6: #{tpu_custom_call.1} parent=1 // loop_footer
      %s18 = sadd.s32 1, %s14
    $region7: #{tpu_custom_call.1} parent=1 // loop_footer_branch
      %13 = sbr.rel target = $region3
    $region8: #{tpu_custom_call.1} parent=1 // loop_exit
      _
    %1182 = vsyncpa [#allocation3], 1
    %s1183 = scalar_lea.sflag [#allocation3], 1
    %1184 = vsyncpa %s1183, 1

</llo_original>
